<compile_context>
chip_gen: v5e
topology: v5e:2x2
jax: 0.10.0
libtpu: 0.0.40
codegen_flags: <defaults>
</compile_context>

<pallas_src>
import functools

import jax
import jax.numpy as jnp
from jax import lax
from jax.experimental import pallas as pl
from jax.experimental.pallas import tpu as pltpu


_INV_SQRT2 = 0.7071067811865476


def _round_up(x, m):
    return ((x + m - 1) // m) * m


def _sublane_multiple(dtype):
    # Dtype-native sublane packing: 8 for f32, 16 for bf16, 32 for int8/fp8.
    itemsize = jnp.dtype(dtype).itemsize
    return max(8, 32 // max(itemsize, 1))


def _device_defaults():
    """Per-generation (tm, tn, vmem_limit_bytes) from the roofline analysis."""
    try:
        kind = jax.devices()[0].device_kind.lower()
    except Exception:  # pragma: no cover - defensive; fall through to defaults
        kind = ""
    if "v6" in kind or "6e" in kind:
        # Needs ~670 flops/byte to be compute-bound -> large token tile.
        return 768, 2048, 100 * 1024 * 1024
    if "v7" in kind or "7x" in kind:
        # 64 MiB physical VMEM per TC -> smaller slabs, leave compiler headroom.
        return 512, 1024, 48 * 1024 * 1024
    # v5e / unknown: tm~256-384 is already at the roofline crossover.
    return 384, 2048, 64 * 1024 * 1024


def _largest_tile_divisor(n, cap, multiple):
    """Largest d <= cap with n % d == 0 and d % multiple == 0, else None."""
    cap = min(cap, n)
    d = (cap // multiple) * multiple
    while d >= multiple:
        if n % d == 0:
            return d
        d -= multiple
    return None


def _phi_mlp_kernel(x_ref, w1_ref, w2_ref, o_ref, acc_ref):
    # x_ref:   (tm, H)   token tile, native dtype
    # w1_ref:  (tn, H)   fc1 weight slab, PyTorch [out, in] layout
    # w2_ref:  (H, tn)   fc2 weight slab, PyTorch [out, in] layout
    # o_ref:   (tm, H)   output tile
    # acc_ref: (tm, H)   f32 accumulator (VMEM scratch, persists across n steps)
    n = pl.program_id(1)

    # fc1 partial: x @ W1_slab^T -> (tm, tn), f32 accumulate on the MXU.
    # TODO(synk): if the Mosaic bundle shows vxpose/XLU work from contracting the
    # RHS lane dim, accept pre-transposed weights at model-load time instead.
    h = lax.dot_general(
        x_ref[...], w1_ref[...],
        dimension_numbers=(((1,), (1,)), ((), ())),
        preferred_element_type=jnp.float32,
    )

    # Exact GELU (matches torch.nn.functional.gelu, approximate='none') in f32.
    # TODO(synk): for very large tm*tn on v7x, chunk this over 512-wide slices
    # of tn to cap the f32 intermediate.
    h = 0.5 * h * (1.0 + lax.erf(h * jnp.float32(_INV_SQRT2)))

    # fc2 partial: gelu(h) @ W2_slab^T -> (tm, H); accumulate in f32 scratch.
    partial = lax.dot_general(
        h.astype(w2_ref.dtype), w2_ref[...],
        dimension_numbers=(((1,), (1,)), ((), ())),
        preferred_element_type=jnp.float32,
    )

    @pl.when(n == 0)
    def _():
        acc_ref[...] = partial            # direct write: no zero-fill + RMW

    @pl.when(n > 0)
    def _():
        acc_ref[...] += partial

    @pl.when(n == pl.num_programs(1) - 1)
    def _():
        o_ref[...] = acc_ref[...].astype(o_ref.dtype)


@functools.partial(jax.jit, static_argnames=("tm", "tn", "vmem_limit_bytes"))
def phi_mlp(hidden_states, w1, w2, *, tm=None, tn=None, vmem_limit_bytes=None):
    """PhiMLP forward.

    hidden_states: [..., H]
    w1: [N_inner, H]   (PyTorch Linear layout [out, in], fc1, no bias)
    w2: [H, N_inner]   (PyTorch Linear layout [out, in], fc2, no bias)
    """
    orig_shape = hidden_states.shape
    H = orig_shape[-1]
    x = hidden_states.reshape(-1, H)          # [T, H]
    T = x.shape[0]

    N = w1.shape[0]
    assert w1.shape == (N, H) and w2.shape == (H, N), \
        "weight shapes must be [N,H], [H,N]"

    tm_def, tn_def, vmem_def = _device_defaults()
    tm = tm_def if tm is None else tm
    tn = tn_def if tn is None else tn
    vmem_limit_bytes = vmem_def if vmem_limit_bytes is None else vmem_limit_bytes

    sub = _sublane_multiple(hidden_states.dtype)

    # Token tile: cap at problem size, keep dtype-native sublane packing.
    tm_eff = min(tm, _round_up(T, sub))
    # Megacore: a single token tile would leave one v7x TensorCore idle on
    # decode-sized calls; split into two tiles when there are enough rows.
    if _round_up(T, tm_eff) // tm_eff == 1 and T > sub:
        tm_eff = min(tm_eff, _round_up((T + 1) // 2, sub))

    # n_inner tile: largest 128-multiple divisor of N that fits under tn.
    tn_eff = _largest_tile_divisor(N, tn, 128)
    if tn_eff is None:
        # TODO(synk): pad n_inner to a 128 multiple for odd configs; full-slab
        # fallback is only intended for tiny n_inner.
        tn_eff = N

    # Pad tokens to a tile multiple (zeros flow through gelu as zeros -> sliced off).
    T_pad = _round_up(T, tm_eff)
    if T_pad != T:
        x = jnp.pad(x, ((0, T_pad - T), (0, 0)))

    grid = (T_pad // tm_eff, N // tn_eff)

    x_bytes = jnp.dtype(hidden_states.dtype).itemsize
    w_bytes = jnp.dtype(w1.dtype).itemsize
    cost = pl.CostEstimate(
        flops=4 * T_pad * H * N,                       # two matmuls, 2*T*H*N each
        transcendentals=T_pad * N,                     # erf per fc1 output element
        bytes_accessed=(T_pad * H * x_bytes * 2        # x in + y out
                        + grid[0] * 2 * N * H * w_bytes),  # W1+W2 per token tile
    )

    out = pl.pallas_call(
        _phi_mlp_kernel,
        out_shape=jax.ShapeDtypeStruct((T_pad, H), hidden_states.dtype),
        grid_spec=pltpu.PrefetchScalarGridSpec(
            num_scalar_prefetch=0,
            grid=grid,
            in_specs=[
                pl.BlockSpec((tm_eff, H), lambda i, n: (i, 0)),   # x tile
                pl.BlockSpec((tn_eff, H), lambda i, n: (n, 0)),   # W1 slab [out, in]
                pl.BlockSpec((H, tn_eff), lambda i, n: (0, n)),   # W2 slab [out, in]
            ],
            out_specs=pl.BlockSpec((tm_eff, H), lambda i, n: (i, 0)),
            scratch_shapes=[pltpu.VMEM((tm_eff, H), jnp.float32)],
        ),
        compiler_params=pltpu.CompilerParams(
            dimension_semantics=("parallel", "arbitrary"),
            vmem_limit_bytes=vmem_limit_bytes,
        ),
        cost_estimate=cost,
    )(x, w1, w2)

    if T_pad != T:
        out = out[:T]
    return out.reshape(orig_shape)


def phi_mlp_ref(hidden_states, w1, w2):
    h = hidden_states.astype(jnp.float32) @ w1.T.astype(jnp.float32)
    h = 0.5 * h * (1.0 + lax.erf(h / jnp.sqrt(2.0)))
    y = h @ w2.T.astype(jnp.float32)
    return y.astype(hidden_states.dtype)


if __name__ == "__main__":
    # Small, module-consistent shapes: batch=2, seq=8, hidden=32, n_inner=4*hidden=128.
    batch, seq, hidden, n_inner = 2, 8, 32, 128

    key = jax.random.PRNGKey(0)
    kx, k1, k2 = jax.random.split(key, 3)
    x = jax.random.normal(kx, (batch, seq, hidden), dtype=jnp.float32)
    # PyTorch Linear weight layout: [out_features, in_features]
    w1 = jax.random.normal(k1, (n_inner, hidden), dtype=jnp.float32) * 0.02
    w2 = jax.random.normal(k2, (hidden, n_inner), dtype=jnp.float32) * 0.02

    y = phi_mlp(x, w1, w2)
    y = jax.block_until_ready(y)

    y_ref = phi_mlp_ref(x, w1, w2)
    assert y.shape == (batch, seq, hidden)
    # Note: with bf16 weights the gelu output is downcast before fc2 (standard
    # mixed precision); the tight tolerance below is for the f32 test case.
    assert jnp.allclose(y, y_ref, atol=2e-5, rtol=2e-5), "mismatch vs reference"

    print("KERNEL_OK")
</pallas_src>

<mosaic_0001>
module attributes {stable_mosaic.version = 11 : i64} {
  func.func @_phi_mlp_kernel(%arg0: i32, %arg1: i32, %arg2: memref<8x32xf32, #tpu.memory_space<vmem>>, %arg3: memref<128x32xf32, #tpu.memory_space<vmem>>, %arg4: memref<32x128xf32, #tpu.memory_space<vmem>>, %arg5: memref<8x32xf32, #tpu.memory_space<vmem>>, %arg6: memref<8x32xf32, #tpu.memory_space<vmem>>) attributes {dimension_semantics = [#tpu.dimension_semantics<parallel>, #tpu.dimension_semantics<arbitrary>], iteration_bounds = array<i64: 2, 1>, scalar_prefetch = 0 : i64, scratch_operands = 1 : i64, tpu.core_type = #tpu.core_type<tc>, window_params = [{transform_indices = @transform_0, window_bounds = array<i64: 8, 32>}, {transform_indices = @transform_1, window_bounds = array<i64: 128, 32>}, {transform_indices = @transform_2, window_bounds = array<i64: 32, 128>}, {transform_indices = @transform_3, window_bounds = array<i64: 8, 32>}]} {
    %c0 = arith.constant 0 : index
    %c0_0 = arith.constant 0 : index
    %0 = vector.load %arg2[%c0, %c0_0] : memref<8x32xf32, #tpu.memory_space<vmem>>, vector<8x32xf32>
    %c0_1 = arith.constant 0 : index
    %c0_2 = arith.constant 0 : index
    %1 = vector.load %arg3[%c0_1, %c0_2] : memref<128x32xf32, #tpu.memory_space<vmem>>, vector<128x32xf32>
    %cst = arith.constant dense<0.000000e+00> : vector<8x128xf32>
    %2 = tpu.matmul %0, %1, %cst {dimension_numbers = #tpu.dot_dimension_numbers<[1], [1], [0], [0], [0, 0, 1, 0], [], []>} : vector<8x32xf32>, vector<128x32xf32>, vector<8x128xf32> -> vector<8x128xf32>
    %cst_3 = arith.constant 5.000000e-01 : f32
    %3 = vector.broadcast %cst_3 : f32 to vector<8x128xf32>
    %4 = arith.mulf %3, %2 : vector<8x128xf32>
    %cst_4 = arith.constant 0.707106769 : f32
    %5 = vector.broadcast %cst_4 : f32 to vector<8x128xf32>
    %6 = arith.mulf %2, %5 : vector<8x128xf32>
    %7 = math.erf %6 : vector<8x128xf32>
    %cst_5 = arith.constant 1.000000e+00 : f32
    %8 = vector.broadcast %cst_5 : f32 to vector<8x128xf32>
    %9 = arith.addf %8, %7 : vector<8x128xf32>
    %10 = arith.mulf %4, %9 : vector<8x128xf32>
    %c0_6 = arith.constant 0 : index
    %c0_7 = arith.constant 0 : index
    %11 = vector.load %arg4[%c0_6, %c0_7] : memref<32x128xf32, #tpu.memory_space<vmem>>, vector<32x128xf32>
    %cst_8 = arith.constant dense<0.000000e+00> : vector<8x32xf32>
    %12 = tpu.matmul %10, %11, %cst_8 {dimension_numbers = #tpu.dot_dimension_numbers<[1], [1], [0], [0], [0, 0, 1, 0], [], []>} : vector<8x128xf32>, vector<32x128xf32>, vector<8x32xf32> -> vector<8x32xf32>
    %c0_i32 = arith.constant 0 : i32
    %13 = arith.cmpi eq, %arg1, %c0_i32 : i32
    %14 = arith.extui %13 : i1 to i32
    %c0_i32_9 = arith.constant 0 : i32
    %15 = arith.cmpi ne, %14, %c0_i32_9 : i32
    scf.if %15 {
      %c0_14 = arith.constant 0 : index
      %c0_15 = arith.constant 0 : index
      %22 = vector.load %arg6[%c0_14, %c0_15] : memref<8x32xf32, #tpu.memory_space<vmem>>, vector<8x32xf32>
      tpu.vector_store %arg6[%c0_14, %c0_15], %12 {strides = array<i32>} : memref<8x32xf32, #tpu.memory_space<vmem>>, vector<8x32xf32>,
    } else {
    }
    %c0_i32_10 = arith.constant 0 : i32
    %16 = arith.cmpi sgt, %arg1, %c0_i32_10 : i32
    %17 = arith.extui %16 : i1 to i32
    %c0_i32_11 = arith.constant 0 : i32
    %18 = arith.cmpi ne, %17, %c0_i32_11 : i32
    scf.if %18 {
      %c0_14 = arith.constant 0 : index
      %c0_15 = arith.constant 0 : index
      %22 = vector.load %arg6[%c0_14, %c0_15] : memref<8x32xf32, #tpu.memory_space<vmem>>, vector<8x32xf32>
      %23 = arith.addf %22, %12 : vector<8x32xf32>
      %c0_16 = arith.constant 0 : index
      %c0_17 = arith.constant 0 : index
      %24 = vector.load %arg6[%c0_16, %c0_17] : memref<8x32xf32, #tpu.memory_space<vmem>>, vector<8x32xf32>
      tpu.vector_store %arg6[%c0_16, %c0_17], %23 {strides = array<i32>} : memref<8x32xf32, #tpu.memory_space<vmem>>, vector<8x32xf32>,
    } else {
    }
    %c0_i32_12 = arith.constant 0 : i32
    %19 = arith.cmpi eq, %arg1, %c0_i32_12 : i32
    %20 = arith.extui %19 : i1 to i32
    %c0_i32_13 = arith.constant 0 : i32
    %21 = arith.cmpi ne, %20, %c0_i32_13 : i32
    scf.if %21 {
      %c0_14 = arith.constant 0 : index
      %c0_15 = arith.constant 0 : index
      %22 = vector.load %arg6[%c0_14, %c0_15] : memref<8x32xf32, #tpu.memory_space<vmem>>, vector<8x32xf32>
      %c0_16 = arith.constant 0 : index
      %c0_17 = arith.constant 0 : index
      %23 = vector.load %arg5[%c0_16, %c0_17] : memref<8x32xf32, #tpu.memory_space<vmem>>, vector<8x32xf32>
      tpu.vector_store %arg5[%c0_16, %c0_17], %22 {strides = array<i32>} : memref<8x32xf32, #tpu.memory_space<vmem>>, vector<8x32xf32>,
    } else {
    }
    return
  }
  func.func @transform_0(%arg0: i32, %arg1: i32) -> (i32, i32) {
    %c0_i32 = arith.constant 0 : i32
    %c0_i32_0 = arith.constant 0 : i32
    return %arg0, %c0_i32 : i32, i32
  }
  func.func @transform_1(%arg0: i32, %arg1: i32) -> (i32, i32) {
    %c0_i32 = arith.constant 0 : i32
    %c0_i32_0 = arith.constant 0 : i32
    return %arg1, %c0_i32 : i32, i32
  }
  func.func @transform_2(%arg0: i32, %arg1: i32) -> (i32, i32) {
    %c0_i32 = arith.constant 0 : i32
    %c0_i32_0 = arith.constant 0 : i32
    return %c0_i32, %arg1 : i32, i32
  }
  func.func @transform_3(%arg0: i32, %arg1: i32) -> (i32, i32) {
    %c0_i32 = arith.constant 0 : i32
    %c0_i32_0 = arith.constant 0 : i32
    return %arg0, %c0_i32 : i32, i32
  }
}

</mosaic_0001>

<llo_original>
// kernel: phi_mlp.1
$region0: #{phi_mlp.1}
  #allocation0 [shape = 'u32[]', space=smem, size = 0x4, offset = 0x4, fixed_abs, tag = 'smem constant byte address 0x4 - core index']
  #allocation1 [shape = 'u32[72,128]{1,0:T(1,128)}', space=vmem, size = 0x9000, scoped, tag = 'internal scratch']
  #allocation2 [shape = 'f32[8,32]{1,0:T(8,128)}', space=vmem, size = 0x1000, scoped, tag = 'scratch operand']
  %s0 = inlined_call_operand.vmem [shape: f32[16,32], index: 0, kind: input, shape index: {}]
  %s1 = inlined_call_operand.vmem [shape: f32[128,32], index: 1, kind: input, shape index: {}]
  %s2 = inlined_call_operand.vmem [shape: f32[32,128], index: 2, kind: input, shape index: {}]
  %s3 = inlined_call_operand.hbm [shape: f32[16,32], index: 3, kind: output, shape index: {}]
  %s4 = sld [smem:[#allocation0]]
  $region57: #{phi_mlp.1} parent=0
    _
  %s6 = ssub.s32 1, %s4
  %s7 = scalar_select 0, %s6, %s4
  $region1: #{phi_mlp.1} parent=0
    #allocation3 [shape = 'u8[8192]{0}', space=vmem, size = 0x2000, scoped, tag = 'output window, operand 0']
    #allocation4 [shape = 's32[2]{0}', space=sflag, size = 0x8, scoped, tag = 'scoped memory for phi_mlp.1']
    %8 = vsyncpa [#allocation4], 0
    %s9 = scalar_lea.sflag [#allocation4], 1
    %10 = vsyncpa %s9, 0
    loop: start=0, step=1, limit=4
    $region2: #{phi_mlp.1} parent=1 // loop_pre_header
      _
    $region3: #{phi_mlp.1} parent=1 // loop_header
      %s12 = sphi 0, %s16
      %p13 = scmp.ge.s32.totalorder %s12, 4
      %s19 = sphi 0, %s31
      %s20 = sphi 0, %s27
      %s21 = sphi 0, %s19
      %s22 = sphi 0, %s20
      %s23 = sphi 0, %s21
      %s24 = sphi 0, %s22
      %s34 = sphi 0, %s36
      %s37 = sphi 0, %s34
      %s38 = sphi 0, %s37
      %s54 = sphi 0, %s38
      %s60 = sphi 0, %s62
      %s63 = sphi 0, %s60
      %s64 = sphi 0, %s63
      %s80 = sphi 0, %s64
      %s86 = sphi 0, %s88
      %s89 = sphi 0, %s86
      %s90 = sphi 0, %s89
      %s106 = sphi 0, %s90
      %s112 = sphi 0, %s114
      %s115 = sphi 0, %s112
      %s116 = sphi 0, %s115
      %s132 = sphi 0, %s116
    $region4: #{phi_mlp.1} parent=1 // loop_header_branch
      %15 = sbr.rel (%p13) target = $region8
    $region5: #{phi_mlp.1} parent=1 // loop_body
      %s17 = ssub.s32 %s12, 1
      %s18 = ssub.s32 %s12, 2
      %s25 = sadd.s32 1, %s20
      %p26 = scmp.ge.s32.totalorder %s25, 1
      %s27 = scalar_select %p26, 0, %s25
      %s28 = sadd.s32 1, %s19
      %s29 = scalar_select %p26, %s28, %s19
      %p30 = scmp.ge.s32.totalorder %s29, 2
      %s31 = scalar_select %p30, 0, %s29
      %s32 = ssub.s32 %s19, %s31
      %p33 = scmp.eq.s32.totalorder %s32, 0
      %s35 = sadd.s32 %s34, 1
      %s36 = scalar_select %p33, %s34, %s35
      %p39 = pneg %p33
      %p40 = scmp.eq.s32.totalorder %s12, 1
      %p41 = por %p39, %p40
      %p42 = scmp.ne.s32.totalorder %s34, %s37
      %p43 = scmp.eq.s32.totalorder %s12, 0
      %p44 = por %p42, %p43
      %p45 = scmp.ne.s32.totalorder %s34, %s37
      %p46 = scmp.eq.s32.totalorder %s17, 1
      %p47 = por %p45, %p46
      %p48 = scmp.ne.s32.totalorder %s37, %s38
      %p49 = scmp.eq.s32.totalorder %s17, 0
      %p50 = por %p48, %p49
      %p51 = scmp.ne.s32.totalorder %s37, %s38
      %p52 = scmp.eq.s32.totalorder %s18, 1
      %p53 = por %p51, %p52
      %p55 = scmp.ne.s32.totalorder %s38, %s54
      %p56 = scmp.eq.s32.totalorder %s18, 0
      %p57 = por %p55, %p56
      %s58 = ssub.s32 %s20, %s27
      %p59 = scmp.eq.s32.totalorder %s58, 0
      %s61 = sadd.s32 %s60, 1
      %s62 = scalar_select %p59, %s60, %s61
      %p65 = pneg %p59
      %p66 = scmp.eq.s32.totalorder %s12, 1
      %p67 = por %p65, %p66
      %p68 = scmp.ne.s32.totalorder %s60, %s63
      %p69 = scmp.eq.s32.totalorder %s12, 0
      %p70 = por %p68, %p69
      %p71 = scmp.ne.s32.totalorder %s60, %s63
      %p72 = scmp.eq.s32.totalorder %s17, 1
      %p73 = por %p71, %p72
      %p74 = scmp.ne.s32.totalorder %s63, %s64
      %p75 = scmp.eq.s32.totalorder %s17, 0
      %p76 = por %p74, %p75
      %p77 = scmp.ne.s32.totalorder %s63, %s64
      %p78 = scmp.eq.s32.totalorder %s18, 1
      %p79 = por %p77, %p78
      %p81 = scmp.ne.s32.totalorder %s64, %s80
      %p82 = scmp.eq.s32.totalorder %s18, 0
      %p83 = por %p81, %p82
      %s84 = ssub.s32 %s20, %s27
      %p85 = scmp.eq.s32.totalorder %s84, 0
      %s87 = sadd.s32 %s86, 1
      %s88 = scalar_select %p85, %s86, %s87
      %p91 = pneg %p85
      %p92 = scmp.eq.s32.totalorder %s12, 1
      %p93 = por %p91, %p92
      %p94 = scmp.ne.s32.totalorder %s86, %s89
      %p95 = scmp.eq.s32.totalorder %s12, 0
      %p96 = por %p94, %p95
      %p97 = scmp.ne.s32.totalorder %s86, %s89
      %p98 = scmp.eq.s32.totalorder %s17, 1
      %p99 = por %p97, %p98
      %p100 = scmp.ne.s32.totalorder %s89, %s90
      %p101 = scmp.eq.s32.totalorder %s17, 0
      %p102 = por %p100, %p101
      %p103 = scmp.ne.s32.totalorder %s89, %s90
      %p104 = scmp.eq.s32.totalorder %s18, 1
      %p105 = por %p103, %p104
      %p107 = scmp.ne.s32.totalorder %s90, %s106
      %p108 = scmp.eq.s32.totalorder %s18, 0
      %p109 = por %p107, %p108
      %s110 = ssub.s32 %s19, %s31
      %p111 = scmp.eq.s32.totalorder %s110, 0
      %s113 = sadd.s32 %s112, 1
      %s114 = scalar_select %p111, %s112, %s113
      %p117 = pneg %p111
      %p118 = scmp.eq.s32.totalorder %s12, 1
      %p119 = por %p117, %p118
      %p120 = scmp.ne.s32.totalorder %s112, %s115
      %p121 = scmp.eq.s32.totalorder %s12, 0
      %p122 = por %p120, %p121
      %p123 = scmp.ne.s32.totalorder %s112, %s115
      %p124 = scmp.eq.s32.totalorder %s17, 1
      %p125 = por %p123, %p124
      %p126 = scmp.ne.s32.totalorder %s115, %s116
      %p127 = scmp.eq.s32.totalorder %s17, 0
      %p128 = por %p126, %p127
      %p129 = scmp.ne.s32.totalorder %s115, %s116
      %p130 = scmp.eq.s32.totalorder %s18, 1
      %p131 = por %p129, %p130
      %p133 = scmp.ne.s32.totalorder %s116, %s132
      %p134 = scmp.eq.s32.totalorder %s18, 0
      %p135 = por %p133, %p134
      %p136 = scmp.le.s32.totalorder 1, %s12
      %p137 = scmp.lt.s32.totalorder %s12, 3
      %p138 = pnand %p136, %p137
      %p139 = pneg %p138
      // Predicated region
      $region9: #{phi_mlp.1} parent=5 // pred_check
        _
      $region10: #{phi_mlp.1} parent=5 // pred_check_branch
        %141 = sbr.rel (%p138) target = $region12
      $region11: #{phi_mlp.1} parent=5 // pred_region
        %s142 = ssub.s32 %s12, 1
        // Predicated region
        $region13: #{phi_mlp.1} parent=11 // pred_check
          %p143 = pneg %p76
        $region14: #{phi_mlp.1} parent=11 // pred_check_branch
          %145 = sbr.rel (%p143) target = $region16
        $region15: #{phi_mlp.1} parent=11 // pred_region
          %s146 = smul.u32 16, %s22
          %p147 = scmp.lt.s32.totalorder %s146, 15
          %s148 = scalar_select %p147, %s146, 15
          %s149 = smul.addr %s148, 8
          %s150 = scalar_lea.vmem %s1, %s149
          %s151 = smul.u32 16, %s22
        $region16: #{phi_mlp.1} parent=11 // pred_fallthru
          _
        // Predicated region
        $region17: #{phi_mlp.1} parent=11 // pred_check
          %p152 = pneg %p102
        $region18: #{phi_mlp.1} parent=11 // pred_check_branch
          %154 = sbr.rel (%p152) target = $region20
        $region19: #{phi_mlp.1} parent=11 // pred_region
          %p155 = scmp.lt.s32.totalorder %s22, 0
          %s156 = scalar_select %p155, %s22, 0
          %s157 = smul.addr %s156, 8
          %s158 = scalar_lea.vmem %s2, %s157
        $region20: #{phi_mlp.1} parent=11 // pred_fallthru
          _
      $region12: #{phi_mlp.1} parent=5 // pred_fallthru
        _
      %p159 = scmp.lt.s32.totalorder %s12, 2
      // Predicated region
      $region21: #{phi_mlp.1} parent=5 // pred_check
        %p160 = pneg %p159
      $region22: #{phi_mlp.1} parent=5 // pred_check_branch
        %162 = sbr.rel (%p160) target = $region24
      $region23: #{phi_mlp.1} parent=5 // pred_region
        // Predicated region
        $region25: #{phi_mlp.1} parent=23 // pred_check
          %p163 = pneg %p44
        $region26: #{phi_mlp.1} parent=23 // pred_check_branch
          %165 = sbr.rel (%p163) target = $region28
        $region27: #{phi_mlp.1} parent=23 // pred_region
          %p166 = scmp.lt.s32.totalorder %s19, 1
          %s167 = scalar_select %p166, %s19, 1
          %s168 = smul.addr %s167, 8
          %s169 = scalar_lea.vmem %s0, %s168
        $region28: #{phi_mlp.1} parent=23 // pred_fallthru
          _
      $region24: #{phi_mlp.1} parent=5 // pred_fallthru
        _
      %p170 = scmp.le.s32.totalorder 1, %s12
      %p171 = scmp.lt.s32.totalorder %s12, 3
      %p172 = pnand %p170, %p171
      %p173 = pneg %p172
      // Predicated region
      $region29: #{phi_mlp.1} parent=5 // pred_check
        _
      $region30: #{phi_mlp.1} parent=5 // pred_check_branch
        %175 = sbr.rel (%p172) target = $region32
      $region31: #{phi_mlp.1} parent=5 // pred_region
        %s176 = ssub.s32 %s12, 1
        %p177 = scmp.lt.s32.totalorder %s21, 1
        %s178 = scalar_select %p177, %s21, 1
        %s179 = smul.addr %s178, 8
        %s180 = scalar_lea.vmem %s0, %s179
        %p181 = pneg %p50
        %p182 = pneg %p47
        %s183 = smul.u32 16, %s22
        %p184 = scmp.lt.s32.totalorder %s183, 15
        %s185 = scalar_select %p184, %s183, 15
        %s186 = smul.addr %s185, 8
        %s187 = scalar_lea.vmem %s1, %s186
        %p188 = pneg %p76
        %p189 = pneg %p73
        %p190 = scmp.lt.s32.totalorder %s22, 0
        %s191 = scalar_select %p190, %s22, 0
        %s192 = smul.addr %s191, 8
        %s193 = scalar_lea.vmem %s2, %s192
        %p194 = pneg %p102
        %p195 = pneg %p99
        %p196 = pneg %p128
        %p197 = pneg %p125
        %s198 = sand.u32 %s115, 1
        %s199 = scalar_lea.sflag [#allocation4], %s198
        %s200 = sand.u32 %s115, 1
        %s201 = smul.addr %s200, 8
        %s202 = scalar_lea.vmem [#allocation3], %s201
        %p203 = scmp.lt.s32.totalorder %s21, 1
        %s204 = scalar_select %p203, %s21, 1
        %s205 = smul.addr %s204, 8
        %s206 = scalar_lea.vmem %s0, %s205
        %s207 = smul.u32 16, %s22
        %p208 = scmp.lt.s32.totalorder %s207, 15
        %s209 = scalar_select %p208, %s207, 15
        %s210 = smul.addr %s209, 8
        %s211 = scalar_lea.vmem %s1, %s210
        %s212 = smul.u32 16, %s22
        %p213 = scmp.lt.s32.totalorder %s22, 0
        %s214 = scalar_select %p213, %s22, 0
        %s215 = smul.addr %s214, 8
        %s216 = scalar_lea.vmem %s2, %s215
        %v217 = vld [vmem:[%s206] sm:$0xff]
        %v218 = vld [vmem:[%s211] sm:$0xff]
        %v219 = vld [vmem:[%s211 + $0x8] sm:$0xff]
        %v220 = vld [vmem:[%s211 + $0x10] sm:$0xff]
        %v221 = vld [vmem:[%s211 + $0x18] sm:$0xff]
        %v222 = vld [vmem:[%s211 + $0x20] sm:$0xff]
        %v223 = vld [vmem:[%s211 + $0x28] sm:$0xff]
        %v224 = vld [vmem:[%s211 + $0x30] sm:$0xff]
        %v225 = vld [vmem:[%s211 + $0x38] sm:$0xff]
        %v226 = vld [vmem:[%s211 + $0x40] sm:$0xff]
        %v227 = vld [vmem:[%s211 + $0x48] sm:$0xff]
        %v228 = vld [vmem:[%s211 + $0x50] sm:$0xff]
        %v229 = vld [vmem:[%s211 + $0x58] sm:$0xff]
        %v230 = vld [vmem:[%s211 + $0x60] sm:$0xff]
        %v231 = vld [vmem:[%s211 + $0x68] sm:$0xff]
        %v232 = vld [vmem:[%s211 + $0x70] sm:$0xff]
        %v233 = vld [vmem:[%s211 + $0x78] sm:$0xff]
        %vm234 = vcmask 261120
        %v236 = vsel %vm234, %v217, 0
        %v239 = vsel %vm234, %v218, 0
        %v242 = vsel %vm234, %v219, 0
        %v245 = vsel %vm234, %v220, 0
        %v248 = vsel %vm234, %v221, 0
        %v251 = vsel %vm234, %v222, 0
        %v254 = vsel %vm234, %v223, 0
        %v257 = vsel %vm234, %v224, 0
        %v260 = vsel %vm234, %v225, 0
        %v263 = vsel %vm234, %v226, 0
        %v266 = vsel %vm234, %v227, 0
        %v269 = vsel %vm234, %v228, 0
        %v272 = vsel %vm234, %v229, 0
        %v275 = vsel %vm234, %v230, 0
        %v278 = vsel %vm234, %v231, 0
        %v281 = vsel %vm234, %v232, 0
        %v284 = vsel %vm234, %v233, 0
        %286 = vmatpush.xpose.msra.mxu0 %v284
        %287 = vmatpush.xpose.msra.mxu0 %v281
        %288 = vmatpush.xpose.msra.mxu0 %v278
        %289 = vmatpush.xpose.msra.mxu0 %v275
        %290 = vmatpush.xpose.msra.mxu0 %v272
        %291 = vmatpush.xpose.msra.mxu0 %v269
        %292 = vmatpush.xpose.msra.mxu0 %v266
        %293 = vmatpush.xpose.msra.mxu0 %v263
        %294 = vmatpush.xpose.msra.mxu0 %v260
        %295 = vmatpush.xpose.msra.mxu0 %v257
        %296 = vmatpush.xpose.msra.mxu0 %v254
        %297 = vmatpush.xpose.msra.mxu0 %v251
        %298 = vmatpush.xpose.msra.mxu0 %v248
        %299 = vmatpush.xpose.msra.mxu0 %v245
        %300 = vmatpush.xpose.msra.mxu0 %v242
        %301 = vmatpush.xpose.msra.mxu0 %v239
        %302 = vmatmul.f32.gmra.mxu0 %v236
        %v303 = vpop.f32.mrf.mxu0
        %v304 = vadd.f32 0.0, %v303
        %305 = vdwg.mxu0
        %v306 = vmul.f32 %v304, 0.5
        %v307 = vmul.f32 %v304, 0.70710677
        %v308 = vmul.f32 %v307, %v307
        %v309 = vmin.f32 16.0, %v308
        %v310 = vmul.f32 %v309, 2.1237322e-06
        %v311 = vadd.f32 %v310, 0.00028619796
        %v312 = vmul.f32 %v309, %v311
        %v313 = vadd.f32 %v312, 0.0036580483
        %v314 = vmul.f32 %v309, %v313
        %v315 = vadd.f32 %v314, 0.05243302
        %v316 = vmul.f32 %v309, %v315
        %v317 = vadd.f32 %v316, 0.18741608
        %v318 = vmul.f32 %v309, %v317
        %v319 = vadd.f32 %v318, 1.1283791
        %v320 = vmul.f32 %v307, %v319
        %v321 = vmul.f32 %v309, 3.8918573e-05
        %v322 = vadd.f32 %v321, 0.001143296
        %v323 = vmul.f32 %v309, %v322
        %v324 = vadd.f32 %v323, 0.014752088
        %v325 = vmul.f32 %v309, %v324
        %v326 = vadd.f32 %v325, 0.112945676
        %v327 = vmul.f32 %v309, %v326
        %v328 = vadd.f32 %v327, 0.4994258
        %v329 = vmul.f32 %v309, %v328
        %v330 = vadd.f32 %v329, 1.0
        %v331 = vrcp.pop %v330
        %v332 = vmul.f32 %v330, %v331
        %v333 = vsub.f32 1.0, %v332
        %v334 = vmul.f32 %v331, %v333
        %v335 = vadd.f32 %v331, %v334
        %vm336 = vweird.f32 %v330
        %vm337 = vweird.f32 %v331
        %vm338 = vmor %vm336, %vm337
        %v339 = vsel %vm338, %v331, %v335
        %v340 = vand.u32 2147483647, %v330
        %vm341 = vcmp.eq.f32.partialorder %v340, 8.507059e+37
        %v342 = vand.u32 %v330, 2147483648
        %v343 = vor.u32 1.1754944e-38, %v342
        %v344 = vsel %vm341, %v343, %v339
        %v345 = vmul.f32 %v320, %v344
        %v346 = vmin.f32 %v345, 1.0
        %v347 = vmax.f32 %v346, -1.0
        %v348 = vadd.f32 %v347, 1.0
        %v349 = vmul.f32 %v306, %v348
        %v350 = vld [vmem:[%s216] sm:$0xff]
        %v351 = vld [vmem:[%s216 + $0x8] sm:$0xff]
        %v352 = vld [vmem:[%s216 + $0x10] sm:$0xff]
        %v353 = vld [vmem:[%s216 + $0x18] sm:$0xff]
        %354 = vmatpush.xpose.msra.mxu0 0.0
        %355 = vmatpush.xpose.msra.mxu0 0.0
        %356 = vmatpush.xpose.msra.mxu0 0.0
        %357 = vmatpush.xpose.msra.mxu0 0.0
        %358 = vmatpush.xpose.msra.mxu0 0.0
        %359 = vmatpush.xpose.msra.mxu0 0.0
        %360 = vmatpush.xpose.msra.mxu0 0.0
        %361 = vmatpush.xpose.msra.mxu0 0.0
        %362 = vmatpush.xpose.msra.mxu0 0.0
        %363 = vmatpush.xpose.msra.mxu0 0.0
        %364 = vmatpush.xpose.msra.mxu0 0.0
        %365 = vmatpush.xpose.msra.mxu0 0.0
        %366 = vmatpush.xpose.msra.mxu0 %v353
        %367 = vmatpush.xpose.msra.mxu0 %v352
        %368 = vmatpush.xpose.msra.mxu0 %v351
        %369 = vmatpush.xpose.msra.mxu0 %v350
        %370 = vmatmul.f32.gmra.mxu0 %v349
        %v371 = vpop.f32.mrf.mxu0
        %v372 = vadd.f32 0.0, %v371
        %373 = vdwg.mxu0
        %p374 = scmp.eq.s32.totalorder %s22, 0
        // Predicated region
        $region33: #{phi_mlp.1} parent=31 // pred_check
          %p375 = pneg %p374
        $region34: #{phi_mlp.1} parent=31 // pred_check_branch
          %377 = sbr.rel (%p375) target = $region36
        $region35: #{phi_mlp.1} parent=31 // pred_region
          %378 = vst.msk [vmem:[#allocation2] sm:$0xff] %vm234, %v372
        $region36: #{phi_mlp.1} parent=31 // pred_fallthru
          _
        %p379 = scmp.gt.s32.totalorder %s22, 0
        // Predicated region
        $region37: #{phi_mlp.1} parent=31 // pred_check
          %p380 = pneg %p379
        $region38: #{phi_mlp.1} parent=31 // pred_check_branch
          %382 = sbr.rel (%p380) target = $region40
        $region39: #{phi_mlp.1} parent=31 // pred_region
          %v383 = vld [vmem:[#allocation2] sm:$0xff]
          %v384 = vadd.f32 %v383, %v372
          %385 = vst.msk [vmem:[#allocation2] sm:$0xff] %vm234, %v384
        $region40: #{phi_mlp.1} parent=31 // pred_fallthru
          _
        // Predicated region
        $region41: #{phi_mlp.1} parent=31 // pred_check
          %p386 = pneg %p374
        $region42: #{phi_mlp.1} parent=31 // pred_check_branch
          %388 = sbr.rel (%p386) target = $region44
        $region43: #{phi_mlp.1} parent=31 // pred_region
          %v389 = vld [vmem:[#allocation2] sm:$0xff]
          %390 = vst.msk [vmem:[%s202] sm:$0xff] %vm234, %v389
        $region44: #{phi_mlp.1} parent=31 // pred_fallthru
          _
        %s391 = sand.u32 %s115, 1
        %s392 = scalar_lea.sflag [#allocation4], %s391
        %s393 = sand.u32 %s115, 1
        %s394 = smul.addr %s393, 8
        %s395 = scalar_lea.vmem [#allocation3], %s394
        // Predicated region
        $region45: #{phi_mlp.1} parent=31 // pred_check
          %p396 = pneg %p125
        $region46: #{phi_mlp.1} parent=31 // pred_check_branch
          %398 = sbr.rel (%p396) target = $region48
        $region47: #{phi_mlp.1} parent=31 // pred_region
          %400 = vsyncadd %s392, 0
          %s401 = smul.addr %s21, 8
          %s402 = scalar_lea.hbm %s3, %s401
          %s404 = sshll.u32 %s395, 4
          %s405 = int_to_ptr.vmem [resolvable:$true] %s404
          %s406 = sshll.u32 %s402, 4
          %s407 = int_to_ptr.hbm [resolvable:$true] %s406
          %409 = dma.vmem_to_hbm [thread:$0]  %s405, 128, %s407, %s392
        $region48: #{phi_mlp.1} parent=31 // pred_fallthru
          _
      $region32: #{phi_mlp.1} parent=5 // pred_fallthru
        _
      %p410 = scmp.le.s32.totalorder 2, %s12
      // Predicated region
      $region49: #{phi_mlp.1} parent=5 // pred_check
        %p411 = pneg %p410
      $region50: #{phi_mlp.1} parent=5 // pred_check_branch
        %413 = sbr.rel (%p411) target = $region52
      $region51: #{phi_mlp.1} parent=5 // pred_region
        %s414 = ssub.s32 %s12, 2
        // Predicated region
        $region53: #{phi_mlp.1} parent=51 // pred_check
          %p415 = pneg %p131
        $region54: #{phi_mlp.1} parent=51 // pred_check_branch
          %417 = sbr.rel (%p415) target = $region56
        $region55: #{phi_mlp.1} parent=51 // pred_region
          %s418 = sand.u32 %s116, 1
          %s419 = scalar_lea.sflag [#allocation4], %s418
          %s420 = sand.u32 %s116, 1
          %s421 = smul.addr %s420, 8
          %s422 = scalar_lea.vmem [#allocation3], %s421
          %424 = dma.done %s419, 128
        $region56: #{phi_mlp.1} parent=51 // pred_fallthru
          _
      $region52: #{phi_mlp.1} parent=5 // pred_fallthru
        _
    $region6: #{phi_mlp.1} parent=1 // loop_footer
      %s16 = sadd.s32 1, %s12
    $region7: #{phi_mlp.1} parent=1 // loop_footer_branch
      %11 = sbr.rel target = $region3
    $region8: #{phi_mlp.1} parent=1 // loop_exit
      _
    %425 = vsyncpa [#allocation4], 1
    %s426 = scalar_lea.sflag [#allocation4], 1
    %427 = vsyncpa %s426, 1

</llo_original>
